<compile_context>
chip_gen: v7x
topology: tpu7x:2x2x1
jax: 0.10.0
libtpu: 0.0.40
codegen_flags: <defaults>
</compile_context>

<pallas_src>
import jax
import jax.numpy as jnp
from jax.experimental import pallas as pl
from jax.experimental.pallas import tpu as pltpu


# Default tile budget. ~2.5 MiB of VMEM with double-buffering, safe on
# v5e/v6e/v7x (v7x only has 64 MiB physical VMEM); large enough to amortize
# the ~0.35 us/grid-step overhead and keep MXU fed (256-aligned N/K tiles).
_TM_MAX = 256
_TN_MAX = 512
_TK_MAX = 512


def _round_up(x, m):
    return ((x + m - 1) // m) * m


def _w8a16_kernel(x_ref, w_ref, scales_ref, bias_ref, o_ref, acc_ref):
    """One (tm, tn) output tile, accumulated over the K grid axis.

    x_ref:      (tm, tk)  bf16 activation tile
    w_ref:      (tk, tn)  int8 weight tile (weights pre-transposed to (K, N))
    scales_ref: (1,  tn)  fp32 per-output-channel scales
    bias_ref:   (1,  tn)  fp32 bias
    o_ref:      (tm, tn)  fp32 output tile
    acc_ref:    (tm, tn)  fp32 VMEM accumulator (persists across K steps)
    """
    k = pl.program_id(2)

    @pl.when(k == 0)
    def _():
        acc_ref[...] = jnp.zeros_like(acc_ref)

    x = x_ref[...]
    # Per-tile dequant cast: int8 stays int8 across the HBM->VMEM DMA.
    w = w_ref[...].astype(x.dtype)
    acc_ref[...] += jnp.dot(x, w, preferred_element_type=jnp.float32)

    # Epilogue: scales/bias applied exactly once per output tile (not per K step).
    @pl.when(k == pl.num_programs(2) - 1)
    def _():
        out = acc_ref[...] * scales_ref[...] + bias_ref[...]
        o_ref[...] = out.astype(o_ref.dtype)


@jax.jit
def w8a16_linear(x, int8_weights, scales, bias=None):
    """x: (..., in_features) bf16; int8_weights: (out, in) int8;
    scales: (out,) fp32; bias: (1, out) fp32 or None. Returns (..., out) fp32."""
    in_features = x.shape[-1]
    out_features = int8_weights.shape[0]
    lead_shape = x.shape[:-1]

    x2d = x.reshape(-1, in_features)
    m, k_dim, n_dim = x2d.shape[0], in_features, out_features

    # Tile selection: clamp to padded problem dims so tiny shapes stay tiny.
    tm = min(_TM_MAX, _round_up(m, 8))        # sublane granularity
    tn = min(_TN_MAX, _round_up(n_dim, 128))  # lane-dense output tile
    tk = min(_TK_MAX, _round_up(k_dim, 128))

    m_pad = _round_up(m, tm)
    n_pad = _round_up(n_dim, tn)
    k_pad = _round_up(k_dim, tk)

    # One-time weight transpose to (K, N): canonical MXU layout, lane-dense N.
    # (In production, pre-transpose at weight-load time so it isn't re-done
    #  per call; weights are static buffers.)
    w_t = int8_weights.T

    if (m_pad, k_pad) != (m, k_dim):
        x2d = jnp.pad(x2d, ((0, m_pad - m), (0, k_pad - k_dim)))
    if (k_pad, n_pad) != (k_dim, n_dim):
        w_t = jnp.pad(w_t, ((0, k_pad - k_dim), (0, n_pad - n_dim)))

    scales2d = scales.reshape(1, n_dim).astype(jnp.float32)
    if bias is None:
        bias2d = jnp.zeros((1, n_dim), jnp.float32)
    else:
        bias2d = bias.reshape(1, n_dim).astype(jnp.float32)
    if n_pad != n_dim:
        scales2d = jnp.pad(scales2d, ((0, 0), (0, n_pad - n_dim)))
        bias2d = jnp.pad(bias2d, ((0, 0), (0, n_pad - n_dim)))

    grid = (m_pad // tm, n_pad // tn, k_pad // tk)

    out_pad = pl.pallas_call(
        _w8a16_kernel,
        out_shape=jax.ShapeDtypeStruct((m_pad, n_pad), jnp.float32),
        grid_spec=pltpu.PrefetchScalarGridSpec(
            num_scalar_prefetch=0,
            grid=grid,
            in_specs=[
                pl.BlockSpec((tm, tk), lambda i, j, k: (i, k)),   # activations
                pl.BlockSpec((tk, tn), lambda i, j, k: (k, j)),   # int8 weights (K, N)
                pl.BlockSpec((1, tn), lambda i, j, k: (0, j)),    # scales
                pl.BlockSpec((1, tn), lambda i, j, k: (0, j)),    # bias
            ],
            out_specs=pl.BlockSpec((tm, tn), lambda i, j, k: (i, j)),
            scratch_shapes=[pltpu.VMEM((tm, tn), jnp.float32)],
        ),
        compiler_params=pltpu.CompilerParams(
            dimension_semantics=("parallel", "parallel", "arbitrary"),
            vmem_limit_bytes=32 * 1024 * 1024,
        ),
    )(x2d, w_t, scales2d, bias2d)

    out2d = out_pad[:m, :n_dim]
    return out2d.reshape(*lead_shape, n_dim)


def reference(x, int8_weights, scales, bias):
    # Pure-JAX reference mirroring the PyTorch code path.
    w = int8_weights.astype(x.dtype)
    out = jnp.matmul(x.astype(jnp.float32), w.T.astype(jnp.float32))
    out = out * scales.astype(jnp.float32)
    if bias is not None:
        out = out + bias.astype(jnp.float32)
    return out


def _check(in_features, out_features, batch, seq, seed, rtol, atol):
    key = jax.random.PRNGKey(seed)
    k_w, k_s, k_b, k_x = jax.random.split(key, 4)

    # Deterministic "buffers" mirroring __init__:
    #   int8_weights ~ randint[-128, 127), scales ~ randn(out), bias ~ randn(1, out)
    int8_weights = jax.random.randint(
        k_w, (out_features, in_features), -128, 127, dtype=jnp.int8)
    scales = jax.random.normal(k_s, (out_features,), dtype=jnp.float32)
    bias = jax.random.normal(k_b, (1, out_features), dtype=jnp.float32)

    # 16-bit activations (bf16 is the TPU-native 16-bit type).
    x = jax.random.normal(k_x, (batch, seq, in_features), dtype=jnp.float32)
    x = x.astype(jnp.bfloat16)

    out = jax.block_until_ready(w8a16_linear(x, int8_weights, scales, bias))
    ref = reference(x, int8_weights, scales, bias)

    assert out.shape == (batch, seq, out_features), out.shape
    assert out.dtype == jnp.float32, out.dtype
    assert jnp.allclose(out, ref, rtol=rtol, atol=atol), \
        float(jnp.max(jnp.abs(out - ref)))


if __name__ == "__main__":
    # Module-implied small shapes: in=32, out=64, input (batch=2, seq=8, in).
    _check(32, 64, 2, 8, seed=0, rtol=2e-2, atol=2e-2)

    # Ragged + multi-K-step shapes: exercises wrapper padding (N=200 -> 256),
    # the fp32 accumulator across two 512-wide K steps, and the epilogue.
    _check(1024, 200, 2, 8, seed=1, rtol=2e-2, atol=5e-1)

    # TODO(synk): for tiny-M decode, a weight-stationary (N,K-outer) loop order
    # reusing each int8 weight tile across M would be the ideal regime.
    print("KERNEL_OK")
</pallas_src>

<mosaic_0001>
module attributes {stable_mosaic.version = 11 : i64} {
  func.func @_w8a16_kernel(%arg0: i32, %arg1: i32, %arg2: i32, %arg3: memref<16x128xbf16, #tpu.memory_space<vmem>>, %arg4: memref<128x128xi8, #tpu.memory_space<vmem>>, %arg5: memref<1x128xf32, #tpu.memory_space<vmem>>, %arg6: memref<1x128xf32, #tpu.memory_space<vmem>>, %arg7: memref<16x128xf32, #tpu.memory_space<vmem>>, %arg8: memref<16x128xf32, #tpu.memory_space<vmem>>) attributes {dimension_semantics = [#tpu.dimension_semantics<parallel>, #tpu.dimension_semantics<parallel>, #tpu.dimension_semantics<arbitrary>], iteration_bounds = array<i64: 1, 1, 1>, scalar_prefetch = 0 : i64, scratch_operands = 1 : i64, tpu.core_type = #tpu.core_type<tc>, window_params = [{transform_indices = @transform_0, window_bounds = array<i64: 16, 128>}, {transform_indices = @transform_1, window_bounds = array<i64: 128, 128>}, {transform_indices = @transform_2, window_bounds = array<i64: 1, 128>}, {transform_indices = @transform_3, window_bounds = array<i64: 1, 128>}, {transform_indices = @transform_4, window_bounds = array<i64: 16, 128>}]} {
    %c0_i32 = arith.constant 0 : i32
    %0 = arith.cmpi eq, %arg2, %c0_i32 : i32
    %1 = arith.extui %0 : i1 to i32
    %c0_i32_0 = arith.constant 0 : i32
    %2 = arith.cmpi ne, %1, %c0_i32_0 : i32
    scf.if %2 {
      %cst_10 = arith.constant 0.000000e+00 : f32
      %13 = vector.broadcast %cst_10 : f32 to vector<16x128xf32>
      %c0_11 = arith.constant 0 : index
      %c0_12 = arith.constant 0 : index
      %14 = vector.load %arg8[%c0_11, %c0_12] : memref<16x128xf32, #tpu.memory_space<vmem>>, vector<16x128xf32>
      tpu.vector_store %arg8[%c0_11, %c0_12], %13 {strides = array<i32>} : memref<16x128xf32, #tpu.memory_space<vmem>>, vector<16x128xf32>,
    } else {
    }
    %c0 = arith.constant 0 : index
    %c0_1 = arith.constant 0 : index
    %3 = vector.load %arg3[%c0, %c0_1] : memref<16x128xbf16, #tpu.memory_space<vmem>>, vector<16x128xbf16>
    %c0_2 = arith.constant 0 : index
    %c0_3 = arith.constant 0 : index
    %4 = vector.load %arg4[%c0_2, %c0_3] : memref<128x128xi8, #tpu.memory_space<vmem>>, vector<128x128xi8>
    %5 = arith.sitofp %4 : vector<128x128xi8> to vector<128x128xbf16>
    %c0_4 = arith.constant 0 : index
    %c0_5 = arith.constant 0 : index
    %6 = vector.load %arg8[%c0_4, %c0_5] : memref<16x128xf32, #tpu.memory_space<vmem>>, vector<16x128xf32>
    %cst = arith.constant dense<0.000000e+00> : vector<16x128xf32>
    %7 = tpu.matmul %3, %5, %cst {dimension_numbers = #tpu.dot_dimension_numbers<[1], [0], [0], [1], [0, 0, 1, 1], [], []>} : vector<16x128xbf16>, vector<128x128xbf16>, vector<16x128xf32> -> vector<16x128xf32>
    %8 = arith.addf %6, %7 : vector<16x128xf32>
    %c0_6 = arith.constant 0 : index
    %c0_7 = arith.constant 0 : index
    %9 = vector.load %arg8[%c0_6, %c0_7] : memref<16x128xf32, #tpu.memory_space<vmem>>, vector<16x128xf32>
    tpu.vector_store %arg8[%c0_6, %c0_7], %8 {strides = array<i32>} : memref<16x128xf32, #tpu.memory_space<vmem>>, vector<16x128xf32>,
    %c0_i32_8 = arith.constant 0 : i32
    %10 = arith.cmpi eq, %arg2, %c0_i32_8 : i32
    %11 = arith.extui %10 : i1 to i32
    %c0_i32_9 = arith.constant 0 : i32
    %12 = arith.cmpi ne, %11, %c0_i32_9 : i32
    scf.if %12 {
      %c0_10 = arith.constant 0 : index
      %c0_11 = arith.constant 0 : index
      %13 = vector.load %arg8[%c0_10, %c0_11] : memref<16x128xf32, #tpu.memory_space<vmem>>, vector<16x128xf32>
      %c0_12 = arith.constant 0 : index
      %c0_13 = arith.constant 0 : index
      %14 = vector.load %arg5[%c0_12, %c0_13] : memref<1x128xf32, #tpu.memory_space<vmem>>, vector<1x128xf32>
      %15 = vector.broadcast %14 : vector<1x128xf32> to vector<16x128xf32>
      %16 = arith.mulf %13, %15 : vector<16x128xf32>
      %c0_14 = arith.constant 0 : index
      %c0_15 = arith.constant 0 : index
      %17 = vector.load %arg6[%c0_14, %c0_15] : memref<1x128xf32, #tpu.memory_space<vmem>>, vector<1x128xf32>
      %18 = vector.broadcast %17 : vector<1x128xf32> to vector<16x128xf32>
      %19 = arith.addf %16, %18 : vector<16x128xf32>
      %c0_16 = arith.constant 0 : index
      %c0_17 = arith.constant 0 : index
      %20 = vector.load %arg7[%c0_16, %c0_17] : memref<16x128xf32, #tpu.memory_space<vmem>>, vector<16x128xf32>
      tpu.vector_store %arg7[%c0_16, %c0_17], %19 {strides = array<i32>} : memref<16x128xf32, #tpu.memory_space<vmem>>, vector<16x128xf32>,
    } else {
    }
    return
  }
  func.func @transform_0(%arg0: i32, %arg1: i32, %arg2: i32) -> (i32, i32) {
    %c0_i32 = arith.constant 0 : i32
    return %arg0, %arg2 : i32, i32
  }
  func.func @transform_1(%arg0: i32, %arg1: i32, %arg2: i32) -> (i32, i32) {
    %c0_i32 = arith.constant 0 : i32
    return %arg2, %arg1 : i32, i32
  }
  func.func @transform_2(%arg0: i32, %arg1: i32, %arg2: i32) -> (i32, i32) {
    %c0_i32 = arith.constant 0 : i32
    %c0_i32_0 = arith.constant 0 : i32
    return %c0_i32, %arg1 : i32, i32
  }
  func.func @transform_3(%arg0: i32, %arg1: i32, %arg2: i32) -> (i32, i32) {
    %c0_i32 = arith.constant 0 : i32
    %c0_i32_0 = arith.constant 0 : i32
    return %c0_i32, %arg1 : i32, i32
  }
  func.func @transform_4(%arg0: i32, %arg1: i32, %arg2: i32) -> (i32, i32) {
    %c0_i32 = arith.constant 0 : i32
    return %arg0, %arg1 : i32, i32
  }
}

</mosaic_0001>

<llo_original>
// kernel: w8a16_linear.1
$region0: #{w8a16_linear.1}
  #allocation0 [shape = 'u32[]', space=smem, size = 0x4, offset = 0x4, fixed_abs, tag = 'smem constant byte address 0x4 - core index']
  #allocation1 [shape = 'u32[144,128]{1,0:T(1,128)}', space=vmem, size = 0x12000, scoped, tag = 'internal scratch']
  #allocation2 [shape = 'f32[16,128]{1,0:T(8,128)}', space=vmem, size = 0x2000, scoped, tag = 'scratch operand']
  %s0 = inlined_call_operand.vmem [shape: bf16[16,128], index: 0, kind: input, shape index: {}]
  %s1 = inlined_call_operand.vmem [shape: s8[128,128], index: 1, kind: input, shape index: {}]
  %s2 = inlined_call_operand.vmem [shape: f32[1,128], index: 2, kind: input, shape index: {}]
  %s3 = inlined_call_operand.vmem [shape: f32[1,128], index: 3, kind: input, shape index: {}]
  %s4 = inlined_call_operand.vmem [shape: f32[16,128], index: 4, kind: output, shape index: {}]
  %s5 = sld [smem:[#allocation0]]
  $region34: #{w8a16_linear.1} parent=0
    _
  %s7 = ssub.s32 1, %s5
  %s8 = scalar_select 0, %s7, %s5
  // Predicated region
  $region2: #{w8a16_linear.1} parent=0 // pred_check
    _
  $region3: #{w8a16_linear.1} parent=0 // pred_check_branch
    %10 = sbr.rel (0) target = $region5
  $region4: #{w8a16_linear.1} parent=0 // pred_region
    _
  $region5: #{w8a16_linear.1} parent=0 // pred_fallthru
    _
  // Predicated region
  $region6: #{w8a16_linear.1} parent=0 // pred_check
    _
  $region7: #{w8a16_linear.1} parent=0 // pred_check_branch
    %12 = sbr.rel (0) target = $region9
  $region8: #{w8a16_linear.1} parent=0 // pred_region
    _
  $region9: #{w8a16_linear.1} parent=0 // pred_fallthru
    _
  // Predicated region
  $region10: #{w8a16_linear.1} parent=0 // pred_check
    _
  $region11: #{w8a16_linear.1} parent=0 // pred_check_branch
    %14 = sbr.rel (0) target = $region13
  $region12: #{w8a16_linear.1} parent=0 // pred_region
    _
  $region13: #{w8a16_linear.1} parent=0 // pred_fallthru
    _
  // Predicated region
  $region14: #{w8a16_linear.1} parent=0 // pred_check
    _
  $region15: #{w8a16_linear.1} parent=0 // pred_check_branch
    %16 = sbr.rel (0) target = $region17
  $region16: #{w8a16_linear.1} parent=0 // pred_region
    _
  $region17: #{w8a16_linear.1} parent=0 // pred_fallthru
    _
  %p18 = scmp.eq.s32.totalorder 0, 0
  // Predicated region
  $region18: #{w8a16_linear.1} parent=0 // pred_check
    %p19 = pneg %p18
  $region19: #{w8a16_linear.1} parent=0 // pred_check_branch
    %21 = sbr.rel (%p19) target = $region21
  $region20: #{w8a16_linear.1} parent=0 // pred_region
    %22 = vst [vmem:[#allocation2] sm:$0xff] 0.0
    %23 = vst [vmem:[#allocation2 + $0x8] sm:$0xff] 0.0
  $region21: #{w8a16_linear.1} parent=0 // pred_fallthru
    _
  %v24 = vld [vmem:[%s0] sm:$0xf]
  %v25 = vld [vmem:[%s0 + $0x4] sm:$0xf]
  %v26 = vld [vmem:[%s1] sm:$0xff]
  %v27 = vld [vmem:[%s1 + $0x8] sm:$0xff]
  %v28 = vld [vmem:[%s1 + $0x10] sm:$0xff]
  %v29 = vld [vmem:[%s1 + $0x18] sm:$0xff]
  %v30 = vunpack.c.l.s8.bf16 %v26
  %v31 = vunpack.c.h.s8.bf16 %v26
  %v32 = vunpack.c.l.s8.bf16 %v27
  %v33 = vunpack.c.h.s8.bf16 %v27
  %v34 = vunpack.c.l.s8.bf16 %v28
  %v35 = vunpack.c.h.s8.bf16 %v28
  %v36 = vunpack.c.l.s8.bf16 %v29
  %v37 = vunpack.c.h.s8.bf16 %v29
  %v38 = vld [vmem:[#allocation2] sm:$0xff]
  %v39 = vld [vmem:[#allocation2 + $0x8] sm:$0xff]
  %v42 = vunpack.c.l.b16 %v24
  %v43 = vunpack.c.l.b16 %v25
  %v44 = vpack.c.b16 %v43, %v42
  %46 = vmatprep.subr.bf16.mxu0 0
  %47 = vmatpush1.bf16.msra.mxu0 %v30
  %48 = vmatprep.subr.bf16.mxu0 0
  %49 = vmatpush1.bf16.msra.mxu0 %v31
  %50 = vmatprep.subr.bf16.mxu0 0
  %51 = vmatpush1.bf16.msra.mxu0 %v32
  %52 = vmatprep.subr.bf16.mxu0 0
  %53 = vmatpush1.bf16.msra.mxu0 %v33
  %54 = vmatprep.subr.bf16.mxu0 0
  %55 = vmatpush1.bf16.msra.mxu0 %v34
  %56 = vmatprep.subr.bf16.mxu0 0
  %57 = vmatpush1.bf16.msra.mxu0 %v35
  %58 = vmatprep.subr.bf16.mxu0 0
  %59 = vmatpush1.bf16.msra.mxu0 %v36
  %60 = vmatprep.subr.bf16.mxu0 0
  %61 = vmatpush1.bf16.msra.mxu0 %v37
  %62 = vmatprep.subr.bf16.mxu0 0
  %63 = vmatpush1.bf16.msra.mxu0 0
  %64 = vmatprep.subr.bf16.mxu0 0
  %65 = vmatpush1.bf16.msra.mxu0 0
  %66 = vmatprep.subr.bf16.mxu0 0
  %67 = vmatpush1.bf16.msra.mxu0 0
  %68 = vmatprep.subr.bf16.mxu0 0
  %69 = vmatpush1.bf16.msra.mxu0 0
  %70 = vmatprep.subr.bf16.mxu0 0
  %71 = vmatpush1.bf16.msra.mxu0 0
  %72 = vmatprep.subr.bf16.mxu0 0
  %73 = vmatpush1.bf16.msra.mxu0 0
  %74 = vmatprep.subr.bf16.mxu0 0
  %75 = vmatpush1.bf16.msra.mxu0 0
  %76 = vmatprep.subr.bf16.mxu0 0
  %77 = vmatpush1.bf16.msra.mxu0 0
  %78 = vmatprep.mubr.bf16.mxu0 0
  %79 = vmatmul.mubr.bf16.gmra.mrb[0].mxu0 %v44
  %v80 = vpop.f32.mrb[0].mxu0
  %v81 = vadd.f32 0.0, %v80
  %v82 = vpop.f32.mrb[0].mxu0
  %v83 = vpop.f32.mrb[0].mxu0
  %v84 = vadd.f32 0.0, %v83
  %v85 = vpop.f32.mrb[0].mxu0
  %86 = vdwg.mxu0
  %v87 = vadd.f32 %v38, %v81
  %v88 = vadd.f32 %v39, %v84
  %89 = vst [vmem:[#allocation2] sm:$0xff] %v87
  %90 = vst [vmem:[#allocation2 + $0x8] sm:$0xff] %v88
  // Predicated region
  $region22: #{w8a16_linear.1} parent=0 // pred_check
    %p91 = pneg %p18
  $region23: #{w8a16_linear.1} parent=0 // pred_check_branch
    %93 = sbr.rel (%p91) target = $region25
  $region24: #{w8a16_linear.1} parent=0 // pred_region
    %v94 = vld [vmem:[#allocation2] sm:$0xff]
    %v95 = vld [vmem:[#allocation2 + $0x8] sm:$0xff]
    %v96 = vld [vmem:[%s2] sm:$0x1]
    %v98 = vlaneseq
    %v99 = vshrl.u32 %v98, 7
    %v100 = vsub.s32 0, %v99
    %v101 = vrot.slane %v96, %v100
    %v103 = vmul.f32 %v94, %v101
    %v104 = vmul.f32 %v95, %v101
    %v105 = vld [vmem:[%s3] sm:$0x1]
    %v107 = vlaneseq
    %v108 = vshrl.u32 %v107, 7
    %v109 = vsub.s32 0, %v108
    %v110 = vrot.slane %v105, %v109
    %v112 = vadd.f32 %v103, %v110
    %v113 = vadd.f32 %v104, %v110
    %114 = vst [vmem:[%s4] sm:$0xff] %v112
    %115 = vst [vmem:[%s4 + $0x8] sm:$0xff] %v113
  $region25: #{w8a16_linear.1} parent=0 // pred_fallthru
    _
  // Predicated region
  $region26: #{w8a16_linear.1} parent=0 // pred_check
    _
  $region27: #{w8a16_linear.1} parent=0 // pred_check_branch
    %117 = sbr.rel (0) target = $region29
  $region28: #{w8a16_linear.1} parent=0 // pred_region
    _
  $region29: #{w8a16_linear.1} parent=0 // pred_fallthru
    _
  // Predicated region
  $region30: #{w8a16_linear.1} parent=0 // pred_check
    _
  $region31: #{w8a16_linear.1} parent=0 // pred_check_branch
    %119 = sbr.rel (0) target = $region33
  $region32: #{w8a16_linear.1} parent=0 // pred_region
    _
  $region33: #{w8a16_linear.1} parent=0 // pred_fallthru
    _

</llo_original>
